<compile_context>
chip_gen: v7x
topology: tpu7x:2x2x1
jax: 0.10.0
libtpu: 0.0.40
codegen_flags: <defaults>
</compile_context>

<pallas_src>
import functools

import jax
import jax.numpy as jnp
from jax.experimental import pallas as pl
from jax.experimental.pallas import tpu as pltpu


def _round_up(x: int, m: int) -> int:
    return ((x + m - 1) // m) * m


def _cdiv(a: int, b: int) -> int:
    return -(-a // b)


def _sac_q_kernel(x_ref, w1_ref, b1_ref, w2_ref, b2_ref, w3_ref, b3_ref, o_ref):
    # Layer 1: [TB, S]bf16 @ [S, 256]bf16 -> f32 acc; bias + ReLU in f32.
    x = x_ref[...].astype(jnp.bfloat16)
    h1 = jnp.dot(x, w1_ref[...], preferred_element_type=jnp.float32)
    h1 = jnp.maximum(h1 + b1_ref[...], 0.0)
    # Layer 2: [TB, 256]bf16 @ [256, 128]bf16 -> f32 acc; bias + ReLU in f32.
    h2 = jnp.dot(h1.astype(jnp.bfloat16), w2_ref[...],
                 preferred_element_type=jnp.float32)
    h2 = jnp.maximum(h2 + b2_ref[...], 0.0)
    # Layer 3 (no activation): [TB, 128]bf16 @ [128, A]bf16 -> f32 acc.
    q = jnp.dot(h2.astype(jnp.bfloat16), w3_ref[...],
                preferred_element_type=jnp.float32)
    o_ref[...] = (q + b3_ref[...]).astype(o_ref.dtype)


@functools.partial(jax.jit, static_argnames=("tb", "out_dtype"))
def sac_q_forward(state_embedding, params, tb: int = 512, out_dtype=jnp.float32):
    """Fused MLP forward. state_embedding: [B, state_size] (f32 or bf16)."""
    B, S = state_embedding.shape
    A = params["w3"].shape[1]

    # --- dtype prep: bf16 weights for the MXU, f32 biases for the VPU ------
    w1 = params["w1"].astype(jnp.bfloat16)          # [S, 256]
    w2 = params["w2"].astype(jnp.bfloat16)          # [256, 128]
    w3 = params["w3"].astype(jnp.bfloat16)          # [128, A]
    b1 = params["b1"].astype(jnp.float32)           # [1, 256]
    b2 = params["b2"].astype(jnp.float32)           # [1, 128]
    b3 = params["b3"].astype(jnp.float32)           # [1, A]

    # --- batch tiling -------------------------------------------------------
    # Minimum number of tiles that respects the tb cap; TB derived from it so
    # the last tile is never mostly zero padding (e.g. B=130 -> 2x72, not 2x128).
    tb_cap = max(int(tb), 8)
    n_tiles = max(1, _cdiv(B, tb_cap))
    # v7x (2 TCs/chip): give each core at least one step for large batches,
    # but never shrink per-step TB below ~256 (keeps the MXU fed).
    num_cores = getattr(jax.devices()[0], "num_cores", 1) or 1
    if num_cores > 1 and B >= num_cores * 256:
        n_tiles = max(n_tiles, int(num_cores))
    TB = _round_up(_cdiv(B, n_tiles), 8)
    B_pad = n_tiles * TB

    x = state_embedding                              # keep incoming dtype
    if B_pad != B:
        x = jnp.pad(x, ((0, B_pad - B), (0, 0)))

    grid = (n_tiles,)

    # Weights/biases: constant index_map -> resident in VMEM across steps.
    resident = lambda arr: pl.BlockSpec(arr.shape, lambda i: (0, 0))

    # --- VMEM budget (double-buffered streams + residents + intermediates) --
    xb = jnp.dtype(x.dtype).itemsize
    ob = jnp.dtype(out_dtype).itemsize
    weight_bytes = (w1.size + w2.size + w3.size) * 2 + (b1.size + b2.size + b3.size) * 4
    vmem_est = (
        2 * TB * S * xb                      # double-buffered x tiles
        + 2 * TB * A * ob                    # double-buffered out tiles
        + weight_bytes
        + TB * S * 2                         # bf16 copy of x
        + TB * 256 * (4 + 2)                 # h1 f32 + bf16
        + TB * 128 * (4 + 2)                 # h2 f32 + bf16
        + TB * max(A, 128) * 4               # q f32
    )
    vmem_limit = int(min(48 * (1 << 20), max(32 * (1 << 20), 2 * vmem_est)))

    flops = 2 * B_pad * (S * 256 + 256 * 128 + 128 * A)
    bytes_accessed = B_pad * S * xb + weight_bytes + B_pad * A * ob

    out = pl.pallas_call(
        _sac_q_kernel,
        out_shape=jax.ShapeDtypeStruct((B_pad, A), out_dtype),
        grid=grid,
        in_specs=[
            pl.BlockSpec((TB, S), lambda i: (i, 0)),   # x tile, pipelined
            resident(w1), resident(b1),
            resident(w2), resident(b2),
            resident(w3), resident(b3),
        ],
        out_specs=pl.BlockSpec((TB, A), lambda i: (i, 0)),
        compiler_params=pltpu.CompilerParams(
            dimension_semantics=("parallel",),
            vmem_limit_bytes=vmem_limit,
        ),
        cost_estimate=pl.CostEstimate(
            flops=flops, transcendentals=0, bytes_accessed=bytes_accessed
        ),
    )(x, w1, b1, w2, b2, w3, b3)

    return out[:B]


def init_params(key, state_size, action_size):
    """Deterministic init mimicking nn.Linear (uniform +-1/sqrt(fan_in)).

    Weights are stored as [in_features, out_features] (transposed vs.
    PyTorch's nn.Linear) so each layer is a plain `x @ W + b`.
    """
    def linear(k, fan_in, fan_out):
        kw, kb = jax.random.split(k)
        bound = 1.0 / jnp.sqrt(jnp.float32(fan_in))
        w = jax.random.uniform(kw, (fan_in, fan_out), jnp.float32, -bound, bound)
        b = jax.random.uniform(kb, (1, fan_out), jnp.float32, -bound, bound)
        return w, b

    k1, k2, k3 = jax.random.split(key, 3)
    w1, b1 = linear(k1, state_size, 256)
    w2, b2 = linear(k2, 256, 128)
    w3, b3 = linear(k3, 128, action_size)
    return {"w1": w1, "b1": b1, "w2": w2, "b2": b2, "w3": w3, "b3": b3}


def reference_forward(x, params):
    """Pure-JAX reference mirroring the kernel's bf16-weight / f32-accum math."""
    w1 = params["w1"].astype(jnp.bfloat16)
    w2 = params["w2"].astype(jnp.bfloat16)
    w3 = params["w3"].astype(jnp.bfloat16)
    h1 = jnp.dot(x.astype(jnp.bfloat16), w1, preferred_element_type=jnp.float32)
    h1 = jnp.maximum(h1 + params["b1"], 0.0)
    h2 = jnp.dot(h1.astype(jnp.bfloat16), w2, preferred_element_type=jnp.float32)
    h2 = jnp.maximum(h2 + params["b2"], 0.0)
    q = jnp.dot(h2.astype(jnp.bfloat16), w3, preferred_element_type=jnp.float32)
    return q + params["b3"]


if __name__ == "__main__":
    key = jax.random.PRNGKey(0)
    k_param, k_x = jax.random.split(key)

    batch = 2
    state_size = 64
    action_size = 16

    params = init_params(k_param, state_size, action_size)
    x = jax.random.normal(k_x, (batch, state_size), jnp.float32)

    q = sac_q_forward(x, params)
    q = jax.block_until_ready(q)

    q_ref = reference_forward(x, params)
    assert q.shape == (batch, action_size)
    assert jnp.allclose(q, q_ref, atol=1e-2, rtol=1e-2), "mismatch vs JAX reference"

    print("KERNEL_OK")
</pallas_src>

<mosaic_0001>
module attributes {stable_mosaic.version = 11 : i64} {
  func.func @_sac_q_kernel(%arg0: i32, %arg1: memref<8x64xf32, #tpu.memory_space<vmem>>, %arg2: memref<64x256xbf16, #tpu.memory_space<vmem>>, %arg3: memref<1x256xf32, #tpu.memory_space<vmem>>, %arg4: memref<256x128xbf16, #tpu.memory_space<vmem>>, %arg5: memref<1x128xf32, #tpu.memory_space<vmem>>, %arg6: memref<128x16xbf16, #tpu.memory_space<vmem>>, %arg7: memref<1x16xf32, #tpu.memory_space<vmem>>, %arg8: memref<8x16xf32, #tpu.memory_space<vmem>>) attributes {dimension_semantics = [#tpu.dimension_semantics<parallel>], iteration_bounds = array<i64: 1>, scalar_prefetch = 0 : i64, scratch_operands = 0 : i64, tpu.core_type = #tpu.core_type<tc>, window_params = [{transform_indices = @transform_0, window_bounds = array<i64: 8, 64>}, {pipeline_mode = #tpu.pipeline_mode<synchronous>, transform_indices = @transform_1, window_bounds = array<i64: 64, 256>}, {pipeline_mode = #tpu.pipeline_mode<synchronous>, transform_indices = @transform_2, window_bounds = array<i64: 1, 256>}, {pipeline_mode = #tpu.pipeline_mode<synchronous>, transform_indices = @transform_3, window_bounds = array<i64: 256, 128>}, {pipeline_mode = #tpu.pipeline_mode<synchronous>, transform_indices = @transform_4, window_bounds = array<i64: 1, 128>}, {pipeline_mode = #tpu.pipeline_mode<synchronous>, transform_indices = @transform_5, window_bounds = array<i64: 128, 16>}, {pipeline_mode = #tpu.pipeline_mode<synchronous>, transform_indices = @transform_6, window_bounds = array<i64: 1, 16>}, {transform_indices = @transform_7, window_bounds = array<i64: 8, 16>}]} {
    %c0 = arith.constant 0 : index
    %c0_0 = arith.constant 0 : index
    %0 = vector.load %arg1[%c0, %c0_0] : memref<8x64xf32, #tpu.memory_space<vmem>>, vector<8x64xf32>
    %1 = arith.truncf %0 : vector<8x64xf32> to vector<8x64xbf16>
    %c0_1 = arith.constant 0 : index
    %c0_2 = arith.constant 0 : index
    %2 = vector.load %arg2[%c0_1, %c0_2] : memref<64x256xbf16, #tpu.memory_space<vmem>>, vector<64x256xbf16>
    %cst = arith.constant dense<0.000000e+00> : vector<8x256xf32>
    %3 = tpu.matmul %1, %2, %cst {dimension_numbers = #tpu.dot_dimension_numbers<[1], [0], [0], [1], [0, 0, 1, 1], [], []>} : vector<8x64xbf16>, vector<64x256xbf16>, vector<8x256xf32> -> vector<8x256xf32>
    %c0_3 = arith.constant 0 : index
    %c0_4 = arith.constant 0 : index
    %4 = vector.load %arg3[%c0_3, %c0_4] : memref<1x256xf32, #tpu.memory_space<vmem>>, vector<1x256xf32>
    %5 = vector.broadcast %4 : vector<1x256xf32> to vector<8x256xf32>
    %6 = arith.addf %3, %5 : vector<8x256xf32>
    %cst_5 = arith.constant 0.000000e+00 : f32
    %7 = vector.broadcast %cst_5 : f32 to vector<8x256xf32>
    %8 = arith.maximumf %6, %7 : vector<8x256xf32>
    %9 = arith.truncf %8 : vector<8x256xf32> to vector<8x256xbf16>
    %c0_6 = arith.constant 0 : index
    %c0_7 = arith.constant 0 : index
    %10 = vector.load %arg4[%c0_6, %c0_7] : memref<256x128xbf16, #tpu.memory_space<vmem>>, vector<256x128xbf16>
    %cst_8 = arith.constant dense<0.000000e+00> : vector<8x128xf32>
    %11 = tpu.matmul %9, %10, %cst_8 {dimension_numbers = #tpu.dot_dimension_numbers<[1], [0], [0], [1], [0, 0, 1, 1], [], []>} : vector<8x256xbf16>, vector<256x128xbf16>, vector<8x128xf32> -> vector<8x128xf32>
    %c0_9 = arith.constant 0 : index
    %c0_10 = arith.constant 0 : index
    %12 = vector.load %arg5[%c0_9, %c0_10] : memref<1x128xf32, #tpu.memory_space<vmem>>, vector<1x128xf32>
    %13 = vector.broadcast %12 : vector<1x128xf32> to vector<8x128xf32>
    %14 = arith.addf %11, %13 : vector<8x128xf32>
    %cst_11 = arith.constant 0.000000e+00 : f32
    %15 = vector.broadcast %cst_11 : f32 to vector<8x128xf32>
    %16 = arith.maximumf %14, %15 : vector<8x128xf32>
    %17 = arith.truncf %16 : vector<8x128xf32> to vector<8x128xbf16>
    %c0_12 = arith.constant 0 : index
    %c0_13 = arith.constant 0 : index
    %18 = vector.load %arg6[%c0_12, %c0_13] : memref<128x16xbf16, #tpu.memory_space<vmem>>, vector<128x16xbf16>
    %cst_14 = arith.constant dense<0.000000e+00> : vector<8x16xf32>
    %19 = tpu.matmul %17, %18, %cst_14 {dimension_numbers = #tpu.dot_dimension_numbers<[1], [0], [0], [1], [0, 0, 1, 1], [], []>} : vector<8x128xbf16>, vector<128x16xbf16>, vector<8x16xf32> -> vector<8x16xf32>
    %c0_15 = arith.constant 0 : index
    %c0_16 = arith.constant 0 : index
    %20 = vector.load %arg7[%c0_15, %c0_16] : memref<1x16xf32, #tpu.memory_space<vmem>>, vector<1x16xf32>
    %21 = vector.broadcast %20 : vector<1x16xf32> to vector<8x16xf32>
    %22 = arith.addf %19, %21 : vector<8x16xf32>
    %c0_17 = arith.constant 0 : index
    %c0_18 = arith.constant 0 : index
    %23 = vector.load %arg8[%c0_17, %c0_18] : memref<8x16xf32, #tpu.memory_space<vmem>>, vector<8x16xf32>
    tpu.vector_store %arg8[%c0_17, %c0_18], %22 {strides = array<i32>} : memref<8x16xf32, #tpu.memory_space<vmem>>, vector<8x16xf32>,
    return
  }
  func.func @transform_0(%arg0: i32) -> (i32, i32) {
    %c0_i32 = arith.constant 0 : i32
    %c0_i32_0 = arith.constant 0 : i32
    return %arg0, %c0_i32 : i32, i32
  }
  func.func @transform_1(%arg0: i32) -> (i32, i32) {
    %c0_i32 = arith.constant 0 : i32
    %c0_i32_0 = arith.constant 0 : i32
    %c0_i32_1 = arith.constant 0 : i32
    return %c0_i32, %c0_i32_0 : i32, i32
  }
  func.func @transform_2(%arg0: i32) -> (i32, i32) {
    %c0_i32 = arith.constant 0 : i32
    %c0_i32_0 = arith.constant 0 : i32
    %c0_i32_1 = arith.constant 0 : i32
    return %c0_i32, %c0_i32_0 : i32, i32
  }
  func.func @transform_3(%arg0: i32) -> (i32, i32) {
    %c0_i32 = arith.constant 0 : i32
    %c0_i32_0 = arith.constant 0 : i32
    %c0_i32_1 = arith.constant 0 : i32
    return %c0_i32, %c0_i32_0 : i32, i32
  }
  func.func @transform_4(%arg0: i32) -> (i32, i32) {
    %c0_i32 = arith.constant 0 : i32
    %c0_i32_0 = arith.constant 0 : i32
    %c0_i32_1 = arith.constant 0 : i32
    return %c0_i32, %c0_i32_0 : i32, i32
  }
  func.func @transform_5(%arg0: i32) -> (i32, i32) {
    %c0_i32 = arith.constant 0 : i32
    %c0_i32_0 = arith.constant 0 : i32
    %c0_i32_1 = arith.constant 0 : i32
    return %c0_i32, %c0_i32_0 : i32, i32
  }
  func.func @transform_6(%arg0: i32) -> (i32, i32) {
    %c0_i32 = arith.constant 0 : i32
    %c0_i32_0 = arith.constant 0 : i32
    %c0_i32_1 = arith.constant 0 : i32
    return %c0_i32, %c0_i32_0 : i32, i32
  }
  func.func @transform_7(%arg0: i32) -> (i32, i32) {
    %c0_i32 = arith.constant 0 : i32
    %c0_i32_0 = arith.constant 0 : i32
    return %arg0, %c0_i32 : i32, i32
  }
}

</mosaic_0001>

<llo_original>
// kernel: sac_q_forward.1
$region0: #{sac_q_forward.1}
  #allocation0 [shape = 'u32[]', space=smem, size = 0x4, offset = 0x4, fixed_abs, tag = 'smem constant byte address 0x4 - core index']
  #allocation1 [shape = 'u32[144,128]{1,0:T(1,128)}', space=vmem, size = 0x12000, scoped, tag = 'internal scratch']
  %s0 = inlined_call_operand.vmem [shape: f32[8,64], index: 0, kind: input, shape index: {}]
  %s1 = inlined_call_operand.vmem [shape: bf16[64,256], index: 1, kind: input, shape index: {}]
  %s2 = inlined_call_operand.vmem [shape: f32[1,256], index: 2, kind: input, shape index: {}]
  %s3 = inlined_call_operand.vmem [shape: bf16[256,128], index: 3, kind: input, shape index: {}]
  %s4 = inlined_call_operand.vmem [shape: f32[1,128], index: 4, kind: input, shape index: {}]
  %s5 = inlined_call_operand.vmem [shape: bf16[128,16], index: 5, kind: input, shape index: {}]
  %s6 = inlined_call_operand.vmem [shape: f32[1,16], index: 6, kind: input, shape index: {}]
  %s7 = inlined_call_operand.vmem [shape: f32[8,16], index: 7, kind: output, shape index: {}]
  %s8 = sld [smem:[#allocation0]]
  $region38: #{sac_q_forward.1} parent=0
    _
  %s10 = ssub.s32 1, %s8
  %s11 = scalar_select 0, %s10, %s8
  // Predicated region
  $region2: #{sac_q_forward.1} parent=0 // pred_check
    _
  $region3: #{sac_q_forward.1} parent=0 // pred_check_branch
    %13 = sbr.rel (0) target = $region5
  $region4: #{sac_q_forward.1} parent=0 // pred_region
    _
  $region5: #{sac_q_forward.1} parent=0 // pred_fallthru
    _
  // Predicated region
  $region6: #{sac_q_forward.1} parent=0 // pred_check
    _
  $region7: #{sac_q_forward.1} parent=0 // pred_check_branch
    %15 = sbr.rel (0) target = $region9
  $region8: #{sac_q_forward.1} parent=0 // pred_region
    _
  $region9: #{sac_q_forward.1} parent=0 // pred_fallthru
    _
  // Predicated region
  $region10: #{sac_q_forward.1} parent=0 // pred_check
    _
  $region11: #{sac_q_forward.1} parent=0 // pred_check_branch
    %17 = sbr.rel (0) target = $region13
  $region12: #{sac_q_forward.1} parent=0 // pred_region
    _
  $region13: #{sac_q_forward.1} parent=0 // pred_fallthru
    _
  // Predicated region
  $region14: #{sac_q_forward.1} parent=0 // pred_check
    _
  $region15: #{sac_q_forward.1} parent=0 // pred_check_branch
    %19 = sbr.rel (0) target = $region17
  $region16: #{sac_q_forward.1} parent=0 // pred_region
    _
  $region17: #{sac_q_forward.1} parent=0 // pred_fallthru
    _
  // Predicated region
  $region18: #{sac_q_forward.1} parent=0 // pred_check
    _
  $region19: #{sac_q_forward.1} parent=0 // pred_check_branch
    %21 = sbr.rel (0) target = $region21
  $region20: #{sac_q_forward.1} parent=0 // pred_region
    _
  $region21: #{sac_q_forward.1} parent=0 // pred_fallthru
    _
  // Predicated region
  $region22: #{sac_q_forward.1} parent=0 // pred_check
    _
  $region23: #{sac_q_forward.1} parent=0 // pred_check_branch
    %23 = sbr.rel (0) target = $region25
  $region24: #{sac_q_forward.1} parent=0 // pred_region
    _
  $region25: #{sac_q_forward.1} parent=0 // pred_fallthru
    _
  // Predicated region
  $region26: #{sac_q_forward.1} parent=0 // pred_check
    _
  $region27: #{sac_q_forward.1} parent=0 // pred_check_branch
    %25 = sbr.rel (0) target = $region29
  $region28: #{sac_q_forward.1} parent=0 // pred_region
    _
  $region29: #{sac_q_forward.1} parent=0 // pred_fallthru
    _
  %v27 = vld [vmem:[%s0] sm:$0xff]
  %v28 = vpack.c.bf16 %v27, %v27
  %v29 = vld [vmem:[%s1] sm:$0xff]
  %v30 = vld [vmem:[%s1 + $0x8] sm:$0xff]
  %v31 = vld [vmem:[%s1 + $0x10] sm:$0xff]
  %v32 = vld [vmem:[%s1 + $0x18] sm:$0xff]
  %v33 = vld [vmem:[%s1 + $0x20] sm:$0xff]
  %v34 = vld [vmem:[%s1 + $0x28] sm:$0xff]
  %v35 = vld [vmem:[%s1 + $0x30] sm:$0xff]
  %v36 = vld [vmem:[%s1 + $0x38] sm:$0xff]
  %v37 = vld [vmem:[%s2] sm:$0x3]
  %v39 = vlaneseq
  %v40 = vshrl.u32 %v39, 7
  %v41 = vsub.s32 0, %v40
  %v42 = vrot.slane %v37, %v41
  %v43 = vlaneseq
  %v44 = vshrl.u32 %v43, 7
  %v45 = vsub.s32 1, %v44
  %v46 = vrot.slane %v37, %v45
  %v57 = vunpack.c.l.b16 %v29
  %v58 = vunpack.c.h.b16 %v29
  %v59 = vunpack.c.l.b16 %v30
  %v60 = vunpack.c.h.b16 %v30
  %v61 = vunpack.c.l.b16 %v31
  %v62 = vunpack.c.h.b16 %v31
  %v63 = vunpack.c.l.b16 %v32
  %v64 = vunpack.c.h.b16 %v32
  %v65 = vunpack.c.l.b16 %v33
  %v66 = vunpack.c.h.b16 %v33
  %v67 = vunpack.c.l.b16 %v34
  %v68 = vunpack.c.h.b16 %v34
  %v69 = vunpack.c.l.b16 %v35
  %v70 = vunpack.c.h.b16 %v35
  %v71 = vunpack.c.l.b16 %v36
  %v72 = vunpack.c.h.b16 %v36
  %v73 = vpack.c.b16 %v59, %v57
  %v74 = vpack.c.b16 %v60, %v58
  %v75 = vpack.c.b16 %v63, %v61
  %v76 = vpack.c.b16 %v64, %v62
  %v77 = vpack.c.b16 %v67, %v65
  %v78 = vpack.c.b16 %v68, %v66
  %v79 = vpack.c.b16 %v71, %v69
  %v80 = vpack.c.b16 %v72, %v70
  %vm89 = vcmask 523264
  %v91 = vsel %vm89, %v28, 0
  %93 = vmatprep.subr.bf16.mxu0 %v74
  %94 = vmatpush1.bf16.msra.mxu0 %v73
  %95 = vmatprep.subr.bf16.mxu0 %v76
  %96 = vmatpush1.bf16.msra.mxu0 %v75
  %97 = vmatprep.subr.bf16.mxu0 %v78
  %98 = vmatpush1.bf16.msra.mxu0 %v77
  %99 = vmatprep.subr.bf16.mxu0 %v80
  %100 = vmatpush1.bf16.msra.mxu0 %v79
  %101 = vmatprep.subr.bf16.mxu0 0
  %102 = vmatpush1.bf16.msra.mxu0 0
  %103 = vmatprep.subr.bf16.mxu0 0
  %104 = vmatpush1.bf16.msra.mxu0 0
  %105 = vmatprep.subr.bf16.mxu0 0
  %106 = vmatpush1.bf16.msra.mxu0 0
  %107 = vmatprep.subr.bf16.mxu0 0
  %108 = vmatpush1.bf16.msra.mxu0 0
  %109 = vmatprep.subr.bf16.mxu0 0
  %110 = vmatpush1.bf16.msra.mxu0 0
  %111 = vmatprep.subr.bf16.mxu0 0
  %112 = vmatpush1.bf16.msra.mxu0 0
  %113 = vmatprep.subr.bf16.mxu0 0
  %114 = vmatpush1.bf16.msra.mxu0 0
  %115 = vmatprep.subr.bf16.mxu0 0
  %116 = vmatpush1.bf16.msra.mxu0 0
  %117 = vmatprep.subr.bf16.mxu0 0
  %118 = vmatpush1.bf16.msra.mxu0 0
  %119 = vmatprep.subr.bf16.mxu0 0
  %120 = vmatpush1.bf16.msra.mxu0 0
  %121 = vmatprep.subr.bf16.mxu0 0
  %122 = vmatpush1.bf16.msra.mxu0 0
  %123 = vmatprep.subr.bf16.mxu0 0
  %124 = vmatpush1.bf16.msra.mxu0 0
  %125 = vmatprep.mubr.bf16.mxu0 0
  %126 = vmatmul.mubr.bf16.gmra.mrb[0].mxu0 %v91
  %v127 = vpop.f32.mrb[0].mxu0
  %v128 = vadd.f32 %v42, %v127
  %v129 = vpop.f32.mrb[0].mxu0
  %v130 = vadd.f32 %v46, %v129
  %v131 = vpop.f32.mrb[0].mxu0
  %v132 = vpop.f32.mrb[0].mxu0
  %133 = vdwg.mxu0
  %v134 = vmax.f32 %v128, 0.0
  %v135 = vmax.f32 %v130, 0.0
  %v136 = vpack.c.bf16 %v134, %v134
  %v137 = vpack.c.bf16 %v135, %v135
  %v138 = vld [vmem:[%s3] sm:$0xf]
  %v139 = vld [vmem:[%s3 + $0x4] sm:$0xf]
  %v140 = vld [vmem:[%s3 + $0x8] sm:$0xf]
  %v141 = vld [vmem:[%s3 + $0xc] sm:$0xf]
  %v142 = vld [vmem:[%s3 + $0x10] sm:$0xf]
  %v143 = vld [vmem:[%s3 + $0x14] sm:$0xf]
  %v144 = vld [vmem:[%s3 + $0x18] sm:$0xf]
  %v145 = vld [vmem:[%s3 + $0x1c] sm:$0xf]
  %v146 = vld [vmem:[%s3 + $0x20] sm:$0xf]
  %v147 = vld [vmem:[%s3 + $0x24] sm:$0xf]
  %v148 = vld [vmem:[%s3 + $0x28] sm:$0xf]
  %v149 = vld [vmem:[%s3 + $0x2c] sm:$0xf]
  %v150 = vld [vmem:[%s3 + $0x30] sm:$0xf]
  %v151 = vld [vmem:[%s3 + $0x34] sm:$0xf]
  %v152 = vld [vmem:[%s3 + $0x38] sm:$0xf]
  %v153 = vld [vmem:[%s3 + $0x3c] sm:$0xf]
  %v154 = vld [vmem:[%s3 + $0x40] sm:$0xf]
  %v155 = vld [vmem:[%s3 + $0x44] sm:$0xf]
  %v156 = vld [vmem:[%s3 + $0x48] sm:$0xf]
  %v157 = vld [vmem:[%s3 + $0x4c] sm:$0xf]
  %v158 = vld [vmem:[%s3 + $0x50] sm:$0xf]
  %v159 = vld [vmem:[%s3 + $0x54] sm:$0xf]
  %v160 = vld [vmem:[%s3 + $0x58] sm:$0xf]
  %v161 = vld [vmem:[%s3 + $0x5c] sm:$0xf]
  %v162 = vld [vmem:[%s3 + $0x60] sm:$0xf]
  %v163 = vld [vmem:[%s3 + $0x64] sm:$0xf]
  %v164 = vld [vmem:[%s3 + $0x68] sm:$0xf]
  %v165 = vld [vmem:[%s3 + $0x6c] sm:$0xf]
  %v166 = vld [vmem:[%s3 + $0x70] sm:$0xf]
  %v167 = vld [vmem:[%s3 + $0x74] sm:$0xf]
  %v168 = vld [vmem:[%s3 + $0x78] sm:$0xf]
  %v169 = vld [vmem:[%s3 + $0x7c] sm:$0xf]
  %v170 = vld [vmem:[%s4] sm:$0x1]
  %v172 = vlaneseq
  %v173 = vshrl.u32 %v172, 7
  %v174 = vsub.s32 0, %v173
  %v175 = vrot.slane %v170, %v174
  %v209 = vunpack.c.l.b16 %v138
  %v210 = vunpack.c.l.b16 %v139
  %v211 = vunpack.c.l.b16 %v140
  %v212 = vunpack.c.l.b16 %v141
  %v213 = vunpack.c.l.b16 %v142
  %v214 = vunpack.c.l.b16 %v143
  %v215 = vunpack.c.l.b16 %v144
  %v216 = vunpack.c.l.b16 %v145
  %v217 = vunpack.c.l.b16 %v146
  %v218 = vunpack.c.l.b16 %v147
  %v219 = vunpack.c.l.b16 %v148
  %v220 = vunpack.c.l.b16 %v149
  %v221 = vunpack.c.l.b16 %v150
  %v222 = vunpack.c.l.b16 %v151
  %v223 = vunpack.c.l.b16 %v152
  %v224 = vunpack.c.l.b16 %v153
  %v225 = vunpack.c.l.b16 %v154
  %v226 = vunpack.c.l.b16 %v155
  %v227 = vunpack.c.l.b16 %v156
  %v228 = vunpack.c.l.b16 %v157
  %v229 = vunpack.c.l.b16 %v158
  %v230 = vunpack.c.l.b16 %v159
  %v231 = vunpack.c.l.b16 %v160
  %v232 = vunpack.c.l.b16 %v161
  %v233 = vunpack.c.l.b16 %v162
  %v234 = vunpack.c.l.b16 %v163
  %v235 = vunpack.c.l.b16 %v164
  %v236 = vunpack.c.l.b16 %v165
  %v237 = vunpack.c.l.b16 %v166
  %v238 = vunpack.c.l.b16 %v167
  %v239 = vunpack.c.l.b16 %v168
  %v240 = vunpack.c.l.b16 %v169
  %v241 = vpack.c.b16 %v210, %v209
  %v242 = vpack.c.b16 %v212, %v211
  %v243 = vpack.c.b16 %v214, %v213
  %v244 = vpack.c.b16 %v216, %v215
  %v245 = vpack.c.b16 %v218, %v217
  %v246 = vpack.c.b16 %v220, %v219
  %v247 = vpack.c.b16 %v222, %v221
  %v248 = vpack.c.b16 %v224, %v223
  %v249 = vpack.c.b16 %v226, %v225
  %v250 = vpack.c.b16 %v228, %v227
  %v251 = vpack.c.b16 %v230, %v229
  %v252 = vpack.c.b16 %v232, %v231
  %v253 = vpack.c.b16 %v234, %v233
  %v254 = vpack.c.b16 %v236, %v235
  %v255 = vpack.c.b16 %v238, %v237
  %v256 = vpack.c.b16 %v240, %v239
  %273 = vmatprep.subr.bf16.mxu0 0
  %274 = vmatpush1.bf16.msra.mxu0 %v241
  %275 = vmatprep.subr.bf16.mxu0 0
  %276 = vmatpush1.bf16.msra.mxu0 %v242
  %277 = vmatprep.subr.bf16.mxu0 0
  %278 = vmatpush1.bf16.msra.mxu0 %v243
  %279 = vmatprep.subr.bf16.mxu0 0
  %280 = vmatpush1.bf16.msra.mxu0 %v244
  %281 = vmatprep.subr.bf16.mxu0 0
  %282 = vmatpush1.bf16.msra.mxu0 %v245
  %283 = vmatprep.subr.bf16.mxu0 0
  %284 = vmatpush1.bf16.msra.mxu0 %v246
  %285 = vmatprep.subr.bf16.mxu0 0
  %286 = vmatpush1.bf16.msra.mxu0 %v247
  %287 = vmatprep.subr.bf16.mxu0 0
  %288 = vmatpush1.bf16.msra.mxu0 %v248
  %289 = vmatprep.subr.bf16.mxu0 0
  %290 = vmatpush1.bf16.msra.mxu0 %v249
  %291 = vmatprep.subr.bf16.mxu0 0
  %292 = vmatpush1.bf16.msra.mxu0 %v250
  %293 = vmatprep.subr.bf16.mxu0 0
  %294 = vmatpush1.bf16.msra.mxu0 %v251
  %295 = vmatprep.subr.bf16.mxu0 0
  %296 = vmatpush1.bf16.msra.mxu0 %v252
  %297 = vmatprep.subr.bf16.mxu0 0
  %298 = vmatpush1.bf16.msra.mxu0 %v253
  %299 = vmatprep.subr.bf16.mxu0 0
  %300 = vmatpush1.bf16.msra.mxu0 %v254
  %301 = vmatprep.subr.bf16.mxu0 0
  %302 = vmatpush1.bf16.msra.mxu0 %v255
  %303 = vmatprep.subr.bf16.mxu0 0
  %304 = vmatpush1.bf16.msra.mxu0 %v256
  %305 = vmatprep.mubr.bf16.mxu0 %v137
  %306 = vmatmul.mubr.bf16.gmra.mrb[0].mxu0 %v136
  %v307 = vpop.f32.mrb[0].mxu0
  %v308 = vadd.f32 %v175, %v307
  %v309 = vpop.f32.mrb[0].mxu0
  %v310 = vpop.f32.mrb[0].mxu0
  %v311 = vpop.f32.mrb[0].mxu0
  %312 = vdwg.mxu0
  %v313 = vmax.f32 %v308, 0.0
  %v314 = vpack.c.bf16 %v313, %v313
  %v315 = vld [vmem:[%s5] sm:$0xf]
  %v316 = vld [vmem:[%s5 + $0x4] sm:$0xf]
  %v317 = vld [vmem:[%s5 + $0x8] sm:$0xf]
  %v318 = vld [vmem:[%s5 + $0xc] sm:$0xf]
  %v319 = vld [vmem:[%s5 + $0x10] sm:$0xf]
  %v320 = vld [vmem:[%s5 + $0x14] sm:$0xf]
  %v321 = vld [vmem:[%s5 + $0x18] sm:$0xf]
  %v322 = vld [vmem:[%s5 + $0x1c] sm:$0xf]
  %v323 = vld [vmem:[%s5 + $0x20] sm:$0xf]
  %v324 = vld [vmem:[%s5 + $0x24] sm:$0xf]
  %v325 = vld [vmem:[%s5 + $0x28] sm:$0xf]
  %v326 = vld [vmem:[%s5 + $0x2c] sm:$0xf]
  %v327 = vld [vmem:[%s5 + $0x30] sm:$0xf]
  %v328 = vld [vmem:[%s5 + $0x34] sm:$0xf]
  %v329 = vld [vmem:[%s5 + $0x38] sm:$0xf]
  %v330 = vld [vmem:[%s5 + $0x3c] sm:$0xf]
  %v331 = vld [vmem:[%s6] sm:$0x1]
  %v333 = vlaneseq
  %v334 = vshrl.u32 %v333, 7
  %v335 = vsub.s32 0, %v334
  %v336 = vrot.slane %v331, %v335
  %v354 = vunpack.c.l.b16 %v315
  %v355 = vunpack.c.l.b16 %v316
  %v356 = vunpack.c.l.b16 %v317
  %v357 = vunpack.c.l.b16 %v318
  %v358 = vunpack.c.l.b16 %v319
  %v359 = vunpack.c.l.b16 %v320
  %v360 = vunpack.c.l.b16 %v321
  %v361 = vunpack.c.l.b16 %v322
  %v362 = vunpack.c.l.b16 %v323
  %v363 = vunpack.c.l.b16 %v324
  %v364 = vunpack.c.l.b16 %v325
  %v365 = vunpack.c.l.b16 %v326
  %v366 = vunpack.c.l.b16 %v327
  %v367 = vunpack.c.l.b16 %v328
  %v368 = vunpack.c.l.b16 %v329
  %v369 = vunpack.c.l.b16 %v330
  %v370 = vpack.c.b16 %v355, %v354
  %v371 = vpack.c.b16 %v357, %v356
  %v372 = vpack.c.b16 %v359, %v358
  %v373 = vpack.c.b16 %v361, %v360
  %v374 = vpack.c.b16 %v363, %v362
  %v375 = vpack.c.b16 %v365, %v364
  %v376 = vpack.c.b16 %v367, %v366
  %v377 = vpack.c.b16 %v369, %v368
  %386 = vmatprep.subr.bf16.mxu0 0
  %387 = vmatpush1.bf16.msra.mxu0 %v370
  %388 = vmatprep.subr.bf16.mxu0 0
  %389 = vmatpush1.bf16.msra.mxu0 %v371
  %390 = vmatprep.subr.bf16.mxu0 0
  %391 = vmatpush1.bf16.msra.mxu0 %v372
  %392 = vmatprep.subr.bf16.mxu0 0
  %393 = vmatpush1.bf16.msra.mxu0 %v373
  %394 = vmatprep.subr.bf16.mxu0 0
  %395 = vmatpush1.bf16.msra.mxu0 %v374
  %396 = vmatprep.subr.bf16.mxu0 0
  %397 = vmatpush1.bf16.msra.mxu0 %v375
  %398 = vmatprep.subr.bf16.mxu0 0
  %399 = vmatpush1.bf16.msra.mxu0 %v376
  %400 = vmatprep.subr.bf16.mxu0 0
  %401 = vmatpush1.bf16.msra.mxu0 %v377
  %402 = vmatprep.subr.bf16.mxu0 0
  %403 = vmatpush1.bf16.msra.mxu0 0
  %404 = vmatprep.subr.bf16.mxu0 0
  %405 = vmatpush1.bf16.msra.mxu0 0
  %406 = vmatprep.subr.bf16.mxu0 0
  %407 = vmatpush1.bf16.msra.mxu0 0
  %408 = vmatprep.subr.bf16.mxu0 0
  %409 = vmatpush1.bf16.msra.mxu0 0
  %410 = vmatprep.subr.bf16.mxu0 0
  %411 = vmatpush1.bf16.msra.mxu0 0
  %412 = vmatprep.subr.bf16.mxu0 0
  %413 = vmatpush1.bf16.msra.mxu0 0
  %414 = vmatprep.subr.bf16.mxu0 0
  %415 = vmatpush1.bf16.msra.mxu0 0
  %416 = vmatprep.subr.bf16.mxu0 0
  %417 = vmatpush1.bf16.msra.mxu0 0
  %418 = vmatprep.mubr.bf16.mxu0 0
  %419 = vmatmul.mubr.bf16.gmra.mrb[0].mxu0 %v314
  %v420 = vpop.f32.mrb[0].mxu0
  %v421 = vadd.f32 %v336, %v420
  %v422 = vpop.f32.mrb[0].mxu0
  %v423 = vpop.f32.mrb[0].mxu0
  %v424 = vpop.f32.mrb[0].mxu0
  %425 = vdwg.mxu0
  %vm426 = vcmask 130048
  %427 = vst.msk [vmem:[%s7] sm:$0xff] %vm426, %v421
  // Predicated region
  $region30: #{sac_q_forward.1} parent=0 // pred_check
    _
  $region31: #{sac_q_forward.1} parent=0 // pred_check_branch
    %429 = sbr.rel (0) target = $region33
  $region32: #{sac_q_forward.1} parent=0 // pred_region
    _
  $region33: #{sac_q_forward.1} parent=0 // pred_fallthru
    _
  // Predicated region
  $region34: #{sac_q_forward.1} parent=0 // pred_check
    _
  $region35: #{sac_q_forward.1} parent=0 // pred_check_branch
    %431 = sbr.rel (0) target = $region37
  $region36: #{sac_q_forward.1} parent=0 // pred_region
    _
  $region37: #{sac_q_forward.1} parent=0 // pred_fallthru
    _

</llo_original>
